<compile_context>
chip_gen: v7x
topology: tpu7x:2x2x1
jax: 0.10.0
libtpu: 0.0.40
codegen_flags: <defaults>
</compile_context>

<pallas_src>
import jax
import jax.numpy as jnp
from jax.experimental import pallas as pl
from jax.experimental.pallas import tpu as pltpu

EPS = 1e-5


# --------------------------------------------------------------------------- kernel
def nn3_kernel(x_ref, w1_ref, w2_ref, w3_ref, slab_ref, o_ref):
    H1 = w1_ref.shape[1]
    H2 = w2_ref.shape[1]
    H3 = w3_ref.shape[1]

    # bf16 operands into the MXU, f32 accumulation, f32 epilogue.
    xb = x_ref[...].astype(jnp.bfloat16)

    h1 = jnp.dot(xb, w1_ref[...], preferred_element_type=jnp.float32)
    h1 = jnp.maximum(h1 + slab_ref[0:1, 0:H1], 0.0)          # folded BN1 bias + ReLU

    h2 = jnp.dot(h1.astype(jnp.bfloat16), w2_ref[...],
                 preferred_element_type=jnp.float32)
    h2 = jnp.maximum(h2 + slab_ref[1:2, 0:H2], 0.0)          # folded BN2 bias + ReLU

    h3 = jnp.dot(h2.astype(jnp.bfloat16), w3_ref[...],
                 preferred_element_type=jnp.float32)
    h3 = jnp.maximum(h3 + slab_ref[2:3, 0:H3], 0.0)          # folded BN3 bias + ReLU

    # Output layer (out_features = 1): VPU multiply + XLU lane reduction; keeps the MXU
    # (the binding unit for the three matmuls) free of a wasteful N=1 drain.
    wo = slab_ref[3:4, 0:H3]                                  # (1, H3)
    out = jnp.sum(h3 * wo, axis=-1, keepdims=True) + slab_ref[4:5, 0:1]
    o_ref[...] = out.astype(o_ref.dtype)


# --------------------------------------------------------------------------- wrapper
def nn3_forward(x, folded, tile_b=1024):
    """folded = (w1_bf16, w2_bf16, w3_bf16, slab_f32) from fold_params()."""
    w1, w2, w3, slab = folded
    B, F = x.shape

    # batch tile: multiple of 8 sublanes, no larger than needed / requested.
    tile_b = int(max(8, min(tile_b, ((B + 7) // 8) * 8)))
    pad_b = (-B) % tile_b
    if pad_b:
        x = jnp.pad(x, ((0, pad_b), (0, 0)))
    Bp = B + pad_b
    grid = (Bp // tile_b,)

    H1, H2, H3 = w1.shape[1], w2.shape[1], w3.shape[1]
    flops = 2 * Bp * (F * H1 + H1 * H2 + H2 * H3 + H3)
    bytes_accessed = (
        Bp * F * x.dtype.itemsize
        + (w1.size + w2.size + w3.size) * 2        # bf16 weights
        + slab.size * 4
        + Bp * 4                                   # output
    )

    out = pl.pallas_call(
        nn3_kernel,
        out_shape=jax.ShapeDtypeStruct((Bp, 1), jnp.float32),
        grid_spec=pltpu.PrefetchScalarGridSpec(
            num_scalar_prefetch=0,
            grid=grid,
            in_specs=[
                pl.BlockSpec((tile_b, F), lambda i: (i, 0)),   # x: tiled over batch
                pl.BlockSpec(w1.shape, lambda i: (0, 0)),      # weights: VMEM-resident
                pl.BlockSpec(w2.shape, lambda i: (0, 0)),
                pl.BlockSpec(w3.shape, lambda i: (0, 0)),
                pl.BlockSpec(slab.shape, lambda i: (0, 0)),    # packed bias / out-weight slab
            ],
            out_specs=pl.BlockSpec((tile_b, 1), lambda i: (i, 0)),
        ),
        compiler_params=pltpu.CompilerParams(
            dimension_semantics=("parallel",),                 # megacore-shardable batch axis
        ),
        cost_estimate=pl.CostEstimate(
            flops=flops, transcendentals=0, bytes_accessed=bytes_accessed),
    )(x, w1, w2, w3, slab)
    return out[:B]


# ------------------------------------------------------------------- parameter setup
def init_params(key, input_dim, h1=128, h2=64, h3=32):
    """Deterministic synthetic parameters matching NN3.__init__ shapes (PyTorch-style)."""
    ks = jax.random.split(key, 8)

    def linear(kw, kb, fan_in, fan_out):
        bound = 1.0 / jnp.sqrt(fan_in)
        # stored as [in, out] (transposed vs. PyTorch's [out, in]) for x @ W
        w = jax.random.uniform(kw, (fan_in, fan_out), jnp.float32, -bound, bound)
        b = jax.random.uniform(kb, (1, fan_out), jnp.float32, -bound, bound)
        return w, b

    def bn(h):
        idx = jnp.arange(h, dtype=jnp.float32)
        gamma = (1.0 + 0.01 * idx).reshape(1, h)
        beta = (0.05 * jnp.sin(0.5 * idx)).reshape(1, h)
        mean = (0.05 * jnp.sin(idx)).reshape(1, h)
        var = (1.0 + 0.1 * jnp.cos(idx) ** 2).reshape(1, h)
        return gamma, beta, mean, var

    w1, b1 = linear(ks[0], ks[1], input_dim, h1)
    w2, b2 = linear(ks[2], ks[3], h1, h2)
    w3, b3 = linear(ks[4], ks[5], h2, h3)
    wo, bo = linear(ks[6], ks[7], h3, 1)
    g1, be1, m1, v1 = bn(h1)
    g2, be2, m2, v2 = bn(h2)
    g3, be3, m3, v3 = bn(h3)

    return (
        w1, b1, g1, be1, m1, v1,
        w2, b2, g2, be2, m2, v2,
        w3, b3, g3, be3, m3, v3,
        wo, bo,
    )


def fold_params(params):
    """One-time f32 fold of eval-mode BN (+ bias) into the linear weights, then pack
    the small vectors into a single (8, 128) slab and cast weights to bf16."""
    (w1, b1, g1, be1, m1, v1,
     w2, b2, g2, be2, m2, v2,
     w3, b3, g3, be3, m3, v3,
     wo, bo) = params

    def fold(w, b, g, be, m, v):
        s = g * jax.lax.rsqrt(v + EPS)                       # (1, H)
        return w * s, (b - m) * s + be

    w1f, b1f = fold(w1, b1, g1, be1, m1, v1)
    w2f, b2f = fold(w2, b2, g2, be2, m2, v2)
    w3f, b3f = fold(w3, b3, g3, be3, m3, v3)

    H1, H2, H3 = w1f.shape[1], w2f.shape[1], w3f.shape[1]
    slab_w = max(128, -(-max(H1, H2, H3) // 128) * 128)
    slab = jnp.zeros((8, slab_w), jnp.float32)
    slab = slab.at[0, :H1].set(b1f[0])
    slab = slab.at[1, :H2].set(b2f[0])
    slab = slab.at[2, :H3].set(b3f[0])
    slab = slab.at[3, :H3].set(wo[:, 0])                     # output weight row
    slab = slab.at[4, :].set(bo[0, 0])                       # output bias (broadcast)

    return (w1f.astype(jnp.bfloat16),
            w2f.astype(jnp.bfloat16),
            w3f.astype(jnp.bfloat16),
            slab)


# --------------------------------------------------------------------------- references
def nn3_reference(x, params):
    """Exact f32 eval-mode forward matching the PyTorch module (un-fused BN)."""
    (w1, b1, g1, be1, m1, v1,
     w2, b2, g2, be2, m2, v2,
     w3, b3, g3, be3, m3, v3,
     wo, bo) = params

    def block(h, w, b, g, be, m, v):
        h = h @ w + b
        h = (h - m) * jax.lax.rsqrt(v + EPS) * g + be
        return jnp.maximum(h, 0.0)

    h = block(x, w1, b1, g1, be1, m1, v1)
    h = block(h, w2, b2, g2, be2, m2, v2)
    h = block(h, w3, b3, g3, be3, m3, v3)
    return h @ wo + bo


def nn3_reference_folded(x, folded):
    """Same math as the kernel (folded BN, bf16 matmul operands, f32 epilogue)."""
    w1, w2, w3, slab = folded
    H1, H2, H3 = w1.shape[1], w2.shape[1], w3.shape[1]
    b1, b2, b3 = slab[0, :H1], slab[1, :H2], slab[2, :H3]
    wo, bo = slab[3, :H3], slab[4, 0]

    h = jnp.maximum(jnp.dot(x.astype(jnp.bfloat16), w1,
                            preferred_element_type=jnp.float32) + b1, 0.0)
    h = jnp.maximum(jnp.dot(h.astype(jnp.bfloat16), w2,
                            preferred_element_type=jnp.float32) + b2, 0.0)
    h = jnp.maximum(jnp.dot(h.astype(jnp.bfloat16), w3,
                            preferred_element_type=jnp.float32) + b3, 0.0)
    return jnp.sum(h * wo, axis=-1, keepdims=True) + bo


# --------------------------------------------------------------------------- main
if __name__ == "__main__":
    key = jax.random.PRNGKey(0)
    k_x, k_p = jax.random.split(key)

    B, INPUT_DIM = 8, 32
    x = jax.random.normal(k_x, (B, INPUT_DIM), dtype=jnp.float32)
    params = init_params(k_p, INPUT_DIM)
    folded = fold_params(params)

    out = nn3_forward(x, folded)
    out = jax.block_until_ready(out)
    assert out.shape == (B, 1)

    # 1) tight check against a JAX reference doing the exact same folded/bf16 math
    ref_same = nn3_reference_folded(x, folded)
    assert jnp.allclose(out, ref_same, atol=1e-3, rtol=1e-3), \
        "mismatch vs folded/bf16 reference"

    # 2) semantic check against the exact f32 PyTorch-style forward
    #    (bf16 MXU operands introduce sub-percent deviation; use normalized error)
    ref_f32 = nn3_reference(x, params)
    err = float(jnp.max(jnp.abs(out - ref_f32)) / (jnp.max(jnp.abs(ref_f32)) + 1e-6))
    assert err < 0.05, f"normalized error vs f32 reference too large: {err}"

    print("KERNEL_OK")
</pallas_src>

<mosaic_0001>
module attributes {stable_mosaic.version = 11 : i64} {
  func.func @nn3_kernel(%arg0: i32, %arg1: memref<8x32xf32, #tpu.memory_space<vmem>>, %arg2: memref<32x128xbf16, #tpu.memory_space<vmem>>, %arg3: memref<128x64xbf16, #tpu.memory_space<vmem>>, %arg4: memref<64x32xbf16, #tpu.memory_space<vmem>>, %arg5: memref<8x128xf32, #tpu.memory_space<vmem>>, %arg6: memref<8x1xf32, #tpu.memory_space<vmem>>) attributes {dimension_semantics = [#tpu.dimension_semantics<parallel>], iteration_bounds = array<i64: 1>, scalar_prefetch = 0 : i64, scratch_operands = 0 : i64, tpu.core_type = #tpu.core_type<tc>, window_params = [{transform_indices = @transform_0, window_bounds = array<i64: 8, 32>}, {pipeline_mode = #tpu.pipeline_mode<synchronous>, transform_indices = @transform_1, window_bounds = array<i64: 32, 128>}, {pipeline_mode = #tpu.pipeline_mode<synchronous>, transform_indices = @transform_2, window_bounds = array<i64: 128, 64>}, {pipeline_mode = #tpu.pipeline_mode<synchronous>, transform_indices = @transform_3, window_bounds = array<i64: 64, 32>}, {pipeline_mode = #tpu.pipeline_mode<synchronous>, transform_indices = @transform_4, window_bounds = array<i64: 8, 128>}, {transform_indices = @transform_5, window_bounds = array<i64: 8, 1>}]} {
    %c0 = arith.constant 0 : index
    %c0_0 = arith.constant 0 : index
    %0 = vector.load %arg1[%c0, %c0_0] : memref<8x32xf32, #tpu.memory_space<vmem>>, vector<8x32xf32>
    %1 = arith.truncf %0 : vector<8x32xf32> to vector<8x32xbf16>
    %c0_1 = arith.constant 0 : index
    %c0_2 = arith.constant 0 : index
    %2 = vector.load %arg2[%c0_1, %c0_2] : memref<32x128xbf16, #tpu.memory_space<vmem>>, vector<32x128xbf16>
    %cst = arith.constant dense<0.000000e+00> : vector<8x128xf32>
    %3 = tpu.matmul %1, %2, %cst {dimension_numbers = #tpu.dot_dimension_numbers<[1], [0], [0], [1], [0, 0, 1, 1], [], []>} : vector<8x32xbf16>, vector<32x128xbf16>, vector<8x128xf32> -> vector<8x128xf32>
    %c0_3 = arith.constant 0 : index
    %c0_4 = arith.constant 0 : index
    %4 = vector.load %arg5[%c0_3, %c0_4] : memref<8x128xf32, #tpu.memory_space<vmem>>, vector<1x128xf32>
    %5 = vector.broadcast %4 : vector<1x128xf32> to vector<8x128xf32>
    %6 = arith.addf %3, %5 : vector<8x128xf32>
    %cst_5 = arith.constant 0.000000e+00 : f32
    %7 = vector.broadcast %cst_5 : f32 to vector<8x128xf32>
    %8 = arith.maximumf %6, %7 : vector<8x128xf32>
    %9 = arith.truncf %8 : vector<8x128xf32> to vector<8x128xbf16>
    %c0_6 = arith.constant 0 : index
    %c0_7 = arith.constant 0 : index
    %10 = vector.load %arg3[%c0_6, %c0_7] : memref<128x64xbf16, #tpu.memory_space<vmem>>, vector<128x64xbf16>
    %cst_8 = arith.constant dense<0.000000e+00> : vector<8x64xf32>
    %11 = tpu.matmul %9, %10, %cst_8 {dimension_numbers = #tpu.dot_dimension_numbers<[1], [0], [0], [1], [0, 0, 1, 1], [], []>} : vector<8x128xbf16>, vector<128x64xbf16>, vector<8x64xf32> -> vector<8x64xf32>
    %c1 = arith.constant 1 : index
    %c0_9 = arith.constant 0 : index
    %12 = vector.load %arg5[%c1, %c0_9] : memref<8x128xf32, #tpu.memory_space<vmem>>, vector<1x64xf32>
    %13 = vector.broadcast %12 : vector<1x64xf32> to vector<8x64xf32>
    %14 = arith.addf %11, %13 : vector<8x64xf32>
    %cst_10 = arith.constant 0.000000e+00 : f32
    %15 = vector.broadcast %cst_10 : f32 to vector<8x64xf32>
    %16 = arith.maximumf %14, %15 : vector<8x64xf32>
    %17 = arith.truncf %16 : vector<8x64xf32> to vector<8x64xbf16>
    %c0_11 = arith.constant 0 : index
    %c0_12 = arith.constant 0 : index
    %18 = vector.load %arg4[%c0_11, %c0_12] : memref<64x32xbf16, #tpu.memory_space<vmem>>, vector<64x32xbf16>
    %cst_13 = arith.constant dense<0.000000e+00> : vector<8x32xf32>
    %19 = tpu.matmul %17, %18, %cst_13 {dimension_numbers = #tpu.dot_dimension_numbers<[1], [0], [0], [1], [0, 0, 1, 1], [], []>} : vector<8x64xbf16>, vector<64x32xbf16>, vector<8x32xf32> -> vector<8x32xf32>
    %c2 = arith.constant 2 : index
    %c0_14 = arith.constant 0 : index
    %20 = vector.load %arg5[%c2, %c0_14] : memref<8x128xf32, #tpu.memory_space<vmem>>, vector<1x32xf32>
    %21 = vector.broadcast %20 : vector<1x32xf32> to vector<8x32xf32>
    %22 = arith.addf %19, %21 : vector<8x32xf32>
    %cst_15 = arith.constant 0.000000e+00 : f32
    %23 = vector.broadcast %cst_15 : f32 to vector<8x32xf32>
    %24 = arith.maximumf %22, %23 : vector<8x32xf32>
    %c3 = arith.constant 3 : index
    %c0_16 = arith.constant 0 : index
    %25 = vector.load %arg5[%c3, %c0_16] : memref<8x128xf32, #tpu.memory_space<vmem>>, vector<1x32xf32>
    %26 = vector.broadcast %25 : vector<1x32xf32> to vector<8x32xf32>
    %27 = arith.mulf %24, %26 : vector<8x32xf32>
    %cst_17 = arith.constant dense<0.000000e+00> : vector<8xf32>
    %28 = vector.multi_reduction <add>, %27, %cst_17 [1] : vector<8x32xf32> to vector<8xf32>
    %29 = vector.shape_cast %28 : vector<8xf32> to vector<8x1xf32>
    %c4 = arith.constant 4 : index
    %c0_18 = arith.constant 0 : index
    %30 = vector.load %arg5[%c4, %c0_18] : memref<8x128xf32, #tpu.memory_space<vmem>>, vector<1x1xf32>
    %31 = vector.broadcast %30 : vector<1x1xf32> to vector<8x1xf32>
    %32 = arith.addf %29, %31 : vector<8x1xf32>
    %c0_19 = arith.constant 0 : index
    %c0_20 = arith.constant 0 : index
    %33 = vector.load %arg6[%c0_19, %c0_20] : memref<8x1xf32, #tpu.memory_space<vmem>>, vector<8x1xf32>
    tpu.vector_store %arg6[%c0_19, %c0_20], %32 {strides = array<i32>} : memref<8x1xf32, #tpu.memory_space<vmem>>, vector<8x1xf32>,
    return
  }
  func.func @transform_0(%arg0: i32) -> (i32, i32) {
    %c0_i32 = arith.constant 0 : i32
    %c0_i32_0 = arith.constant 0 : i32
    return %arg0, %c0_i32 : i32, i32
  }
  func.func @transform_1(%arg0: i32) -> (i32, i32) {
    %c0_i32 = arith.constant 0 : i32
    %c0_i32_0 = arith.constant 0 : i32
    %c0_i32_1 = arith.constant 0 : i32
    return %c0_i32, %c0_i32_0 : i32, i32
  }
  func.func @transform_2(%arg0: i32) -> (i32, i32) {
    %c0_i32 = arith.constant 0 : i32
    %c0_i32_0 = arith.constant 0 : i32
    %c0_i32_1 = arith.constant 0 : i32
    return %c0_i32, %c0_i32_0 : i32, i32
  }
  func.func @transform_3(%arg0: i32) -> (i32, i32) {
    %c0_i32 = arith.constant 0 : i32
    %c0_i32_0 = arith.constant 0 : i32
    %c0_i32_1 = arith.constant 0 : i32
    return %c0_i32, %c0_i32_0 : i32, i32
  }
  func.func @transform_4(%arg0: i32) -> (i32, i32) {
    %c0_i32 = arith.constant 0 : i32
    %c0_i32_0 = arith.constant 0 : i32
    %c0_i32_1 = arith.constant 0 : i32
    return %c0_i32, %c0_i32_0 : i32, i32
  }
  func.func @transform_5(%arg0: i32) -> (i32, i32) {
    %c0_i32 = arith.constant 0 : i32
    %c0_i32_0 = arith.constant 0 : i32
    return %arg0, %c0_i32 : i32, i32
  }
}

</mosaic_0001>

<llo_original>
// kernel: tpu_custom_call.1
$region0: #{tpu_custom_call.1}
  #allocation0 [shape = 'u32[]', space=smem, size = 0x4, offset = 0x4, fixed_abs, tag = 'smem constant byte address 0x4 - core index']
  #allocation1 [shape = 'u32[144,128]{1,0:T(1,128)}', space=vmem, size = 0x12000, scoped, tag = 'internal scratch']
  %s0 = inlined_call_operand.vmem [shape: f32[8,32], index: 0, kind: input, shape index: {}]
  %s1 = inlined_call_operand.vmem [shape: bf16[32,128], index: 1, kind: input, shape index: {}]
  %s2 = inlined_call_operand.vmem [shape: bf16[128,64], index: 2, kind: input, shape index: {}]
  %s3 = inlined_call_operand.vmem [shape: bf16[64,32], index: 3, kind: input, shape index: {}]
  %s4 = inlined_call_operand.vmem [shape: f32[8,128], index: 4, kind: input, shape index: {}]
  %s5 = inlined_call_operand.vmem [shape: f32[8,1], index: 5, kind: output, shape index: {}]
  %s6 = sld [smem:[#allocation0]]
  $region30: #{tpu_custom_call.1} parent=0
    _
  %s8 = ssub.s32 1, %s6
  %s9 = scalar_select 0, %s8, %s6
  // Predicated region
  $region2: #{tpu_custom_call.1} parent=0 // pred_check
    _
  $region3: #{tpu_custom_call.1} parent=0 // pred_check_branch
    %11 = sbr.rel (0) target = $region5
  $region4: #{tpu_custom_call.1} parent=0 // pred_region
    _
  $region5: #{tpu_custom_call.1} parent=0 // pred_fallthru
    _
  // Predicated region
  $region6: #{tpu_custom_call.1} parent=0 // pred_check
    _
  $region7: #{tpu_custom_call.1} parent=0 // pred_check_branch
    %13 = sbr.rel (0) target = $region9
  $region8: #{tpu_custom_call.1} parent=0 // pred_region
    _
  $region9: #{tpu_custom_call.1} parent=0 // pred_fallthru
    _
  // Predicated region
  $region10: #{tpu_custom_call.1} parent=0 // pred_check
    _
  $region11: #{tpu_custom_call.1} parent=0 // pred_check_branch
    %15 = sbr.rel (0) target = $region13
  $region12: #{tpu_custom_call.1} parent=0 // pred_region
    _
  $region13: #{tpu_custom_call.1} parent=0 // pred_fallthru
    _
  // Predicated region
  $region14: #{tpu_custom_call.1} parent=0 // pred_check
    _
  $region15: #{tpu_custom_call.1} parent=0 // pred_check_branch
    %17 = sbr.rel (0) target = $region17
  $region16: #{tpu_custom_call.1} parent=0 // pred_region
    _
  $region17: #{tpu_custom_call.1} parent=0 // pred_fallthru
    _
  // Predicated region
  $region18: #{tpu_custom_call.1} parent=0 // pred_check
    _
  $region19: #{tpu_custom_call.1} parent=0 // pred_check_branch
    %19 = sbr.rel (0) target = $region21
  $region20: #{tpu_custom_call.1} parent=0 // pred_region
    _
  $region21: #{tpu_custom_call.1} parent=0 // pred_fallthru
    _
  %v21 = vld [vmem:[%s0] sm:$0xff]
  %v22 = vpack.c.bf16 %v21, %v21
  %v23 = vld [vmem:[%s1] sm:$0xf]
  %v24 = vld [vmem:[%s1 + $0x4] sm:$0xf]
  %v25 = vld [vmem:[%s1 + $0x8] sm:$0xf]
  %v26 = vld [vmem:[%s1 + $0xc] sm:$0xf]
  %v27 = vld [vmem:[%s4] sm:$0x1]
  %v28 = vlaneseq
  %v29 = vshrl.u32 %v28, 7
  %v30 = vsub.s32 0, %v29
  %v31 = vrot.slane %v27, %v30
  %v36 = vunpack.c.l.b16 %v23
  %v37 = vunpack.c.l.b16 %v24
  %v38 = vunpack.c.l.b16 %v25
  %v39 = vunpack.c.l.b16 %v26
  %v40 = vpack.c.b16 %v37, %v36
  %v41 = vpack.c.b16 %v39, %v38
  %vm44 = vcmask 261120
  %v46 = vsel %vm44, %v22, 0
  %48 = vmatprep.subr.bf16.mxu0 0
  %49 = vmatpush1.bf16.msra.mxu0 %v40
  %50 = vmatprep.subr.bf16.mxu0 0
  %51 = vmatpush1.bf16.msra.mxu0 %v41
  %52 = vmatprep.subr.bf16.mxu0 0
  %53 = vmatpush1.bf16.msra.mxu0 0
  %54 = vmatprep.subr.bf16.mxu0 0
  %55 = vmatpush1.bf16.msra.mxu0 0
  %56 = vmatprep.subr.bf16.mxu0 0
  %57 = vmatpush1.bf16.msra.mxu0 0
  %58 = vmatprep.subr.bf16.mxu0 0
  %59 = vmatpush1.bf16.msra.mxu0 0
  %60 = vmatprep.subr.bf16.mxu0 0
  %61 = vmatpush1.bf16.msra.mxu0 0
  %62 = vmatprep.subr.bf16.mxu0 0
  %63 = vmatpush1.bf16.msra.mxu0 0
  %64 = vmatprep.subr.bf16.mxu0 0
  %65 = vmatpush1.bf16.msra.mxu0 0
  %66 = vmatprep.subr.bf16.mxu0 0
  %67 = vmatpush1.bf16.msra.mxu0 0
  %68 = vmatprep.subr.bf16.mxu0 0
  %69 = vmatpush1.bf16.msra.mxu0 0
  %70 = vmatprep.subr.bf16.mxu0 0
  %71 = vmatpush1.bf16.msra.mxu0 0
  %72 = vmatprep.subr.bf16.mxu0 0
  %73 = vmatpush1.bf16.msra.mxu0 0
  %74 = vmatprep.subr.bf16.mxu0 0
  %75 = vmatpush1.bf16.msra.mxu0 0
  %76 = vmatprep.subr.bf16.mxu0 0
  %77 = vmatpush1.bf16.msra.mxu0 0
  %78 = vmatprep.subr.bf16.mxu0 0
  %79 = vmatpush1.bf16.msra.mxu0 0
  %80 = vmatprep.mubr.bf16.mxu0 0
  %81 = vmatmul.mubr.bf16.gmra.mrb[0].mxu0 %v46
  %v82 = vpop.f32.mrb[0].mxu0
  %v83 = vadd.f32 %v31, %v82
  %v84 = vpop.f32.mrb[0].mxu0
  %v85 = vpop.f32.mrb[0].mxu0
  %v86 = vpop.f32.mrb[0].mxu0
  %87 = vdwg.mxu0
  %v88 = vmax.f32 %v83, 0.0
  %v89 = vpack.c.bf16 %v88, %v88
  %v90 = vld [vmem:[%s2] sm:$0xf]
  %v91 = vld [vmem:[%s2 + $0x4] sm:$0xf]
  %v92 = vld [vmem:[%s2 + $0x8] sm:$0xf]
  %v93 = vld [vmem:[%s2 + $0xc] sm:$0xf]
  %v94 = vld [vmem:[%s2 + $0x10] sm:$0xf]
  %v95 = vld [vmem:[%s2 + $0x14] sm:$0xf]
  %v96 = vld [vmem:[%s2 + $0x18] sm:$0xf]
  %v97 = vld [vmem:[%s2 + $0x1c] sm:$0xf]
  %v98 = vld [vmem:[%s2 + $0x20] sm:$0xf]
  %v99 = vld [vmem:[%s2 + $0x24] sm:$0xf]
  %v100 = vld [vmem:[%s2 + $0x28] sm:$0xf]
  %v101 = vld [vmem:[%s2 + $0x2c] sm:$0xf]
  %v102 = vld [vmem:[%s2 + $0x30] sm:$0xf]
  %v103 = vld [vmem:[%s2 + $0x34] sm:$0xf]
  %v104 = vld [vmem:[%s2 + $0x38] sm:$0xf]
  %v105 = vld [vmem:[%s2 + $0x3c] sm:$0xf]
  %v106 = vld [vmem:[%s4 + $0x1] sm:$0x1]
  %v107 = vlaneseq
  %v108 = vshrl.u32 %v107, 7
  %v109 = vsub.s32 0, %v108
  %v110 = vrot.slane %v106, %v109
  %v127 = vunpack.c.l.b16 %v90
  %v128 = vunpack.c.l.b16 %v91
  %v129 = vunpack.c.l.b16 %v92
  %v130 = vunpack.c.l.b16 %v93
  %v131 = vunpack.c.l.b16 %v94
  %v132 = vunpack.c.l.b16 %v95
  %v133 = vunpack.c.l.b16 %v96
  %v134 = vunpack.c.l.b16 %v97
  %v135 = vunpack.c.l.b16 %v98
  %v136 = vunpack.c.l.b16 %v99
  %v137 = vunpack.c.l.b16 %v100
  %v138 = vunpack.c.l.b16 %v101
  %v139 = vunpack.c.l.b16 %v102
  %v140 = vunpack.c.l.b16 %v103
  %v141 = vunpack.c.l.b16 %v104
  %v142 = vunpack.c.l.b16 %v105
  %v143 = vpack.c.b16 %v128, %v127
  %v144 = vpack.c.b16 %v130, %v129
  %v145 = vpack.c.b16 %v132, %v131
  %v146 = vpack.c.b16 %v134, %v133
  %v147 = vpack.c.b16 %v136, %v135
  %v148 = vpack.c.b16 %v138, %v137
  %v149 = vpack.c.b16 %v140, %v139
  %v150 = vpack.c.b16 %v142, %v141
  %159 = vmatprep.subr.bf16.mxu0 0
  %160 = vmatpush1.bf16.msra.mxu0 %v143
  %161 = vmatprep.subr.bf16.mxu0 0
  %162 = vmatpush1.bf16.msra.mxu0 %v144
  %163 = vmatprep.subr.bf16.mxu0 0
  %164 = vmatpush1.bf16.msra.mxu0 %v145
  %165 = vmatprep.subr.bf16.mxu0 0
  %166 = vmatpush1.bf16.msra.mxu0 %v146
  %167 = vmatprep.subr.bf16.mxu0 0
  %168 = vmatpush1.bf16.msra.mxu0 %v147
  %169 = vmatprep.subr.bf16.mxu0 0
  %170 = vmatpush1.bf16.msra.mxu0 %v148
  %171 = vmatprep.subr.bf16.mxu0 0
  %172 = vmatpush1.bf16.msra.mxu0 %v149
  %173 = vmatprep.subr.bf16.mxu0 0
  %174 = vmatpush1.bf16.msra.mxu0 %v150
  %175 = vmatprep.subr.bf16.mxu0 0
  %176 = vmatpush1.bf16.msra.mxu0 0
  %177 = vmatprep.subr.bf16.mxu0 0
  %178 = vmatpush1.bf16.msra.mxu0 0
  %179 = vmatprep.subr.bf16.mxu0 0
  %180 = vmatpush1.bf16.msra.mxu0 0
  %181 = vmatprep.subr.bf16.mxu0 0
  %182 = vmatpush1.bf16.msra.mxu0 0
  %183 = vmatprep.subr.bf16.mxu0 0
  %184 = vmatpush1.bf16.msra.mxu0 0
  %185 = vmatprep.subr.bf16.mxu0 0
  %186 = vmatpush1.bf16.msra.mxu0 0
  %187 = vmatprep.subr.bf16.mxu0 0
  %188 = vmatpush1.bf16.msra.mxu0 0
  %189 = vmatprep.subr.bf16.mxu0 0
  %190 = vmatpush1.bf16.msra.mxu0 0
  %191 = vmatprep.mubr.bf16.mxu0 0
  %192 = vmatmul.mubr.bf16.gmra.mrb[0].mxu0 %v89
  %v193 = vpop.f32.mrb[0].mxu0
  %v194 = vadd.f32 %v110, %v193
  %v195 = vpop.f32.mrb[0].mxu0
  %v196 = vpop.f32.mrb[0].mxu0
  %v197 = vpop.f32.mrb[0].mxu0
  %198 = vdwg.mxu0
  %v199 = vmax.f32 %v194, 0.0
  %v200 = vpack.c.bf16 %v199, %v199
  %v201 = vld [vmem:[%s3] sm:$0xf]
  %v202 = vld [vmem:[%s3 + $0x4] sm:$0xf]
  %v203 = vld [vmem:[%s3 + $0x8] sm:$0xf]
  %v204 = vld [vmem:[%s3 + $0xc] sm:$0xf]
  %v205 = vld [vmem:[%s3 + $0x10] sm:$0xf]
  %v206 = vld [vmem:[%s3 + $0x14] sm:$0xf]
  %v207 = vld [vmem:[%s3 + $0x18] sm:$0xf]
  %v208 = vld [vmem:[%s3 + $0x1c] sm:$0xf]
  %v209 = vld [vmem:[%s4 + $0x2] sm:$0x1]
  %v210 = vlaneseq
  %v211 = vshrl.u32 %v210, 7
  %v212 = vsub.s32 0, %v211
  %v213 = vrot.slane %v209, %v212
  %v222 = vunpack.c.l.b16 %v201
  %v223 = vunpack.c.l.b16 %v202
  %v224 = vunpack.c.l.b16 %v203
  %v225 = vunpack.c.l.b16 %v204
  %v226 = vunpack.c.l.b16 %v205
  %v227 = vunpack.c.l.b16 %v206
  %v228 = vunpack.c.l.b16 %v207
  %v229 = vunpack.c.l.b16 %v208
  %v230 = vpack.c.b16 %v223, %v222
  %v231 = vpack.c.b16 %v225, %v224
  %v232 = vpack.c.b16 %v227, %v226
  %v233 = vpack.c.b16 %v229, %v228
  %vm238 = vcmask 523264
  %v240 = vsel %vm238, %v200, 0
  %242 = vmatprep.subr.bf16.mxu0 0
  %243 = vmatpush1.bf16.msra.mxu0 %v230
  %244 = vmatprep.subr.bf16.mxu0 0
  %245 = vmatpush1.bf16.msra.mxu0 %v231
  %246 = vmatprep.subr.bf16.mxu0 0
  %247 = vmatpush1.bf16.msra.mxu0 %v232
  %248 = vmatprep.subr.bf16.mxu0 0
  %249 = vmatpush1.bf16.msra.mxu0 %v233
  %250 = vmatprep.subr.bf16.mxu0 0
  %251 = vmatpush1.bf16.msra.mxu0 0
  %252 = vmatprep.subr.bf16.mxu0 0
  %253 = vmatpush1.bf16.msra.mxu0 0
  %254 = vmatprep.subr.bf16.mxu0 0
  %255 = vmatpush1.bf16.msra.mxu0 0
  %256 = vmatprep.subr.bf16.mxu0 0
  %257 = vmatpush1.bf16.msra.mxu0 0
  %258 = vmatprep.subr.bf16.mxu0 0
  %259 = vmatpush1.bf16.msra.mxu0 0
  %260 = vmatprep.subr.bf16.mxu0 0
  %261 = vmatpush1.bf16.msra.mxu0 0
  %262 = vmatprep.subr.bf16.mxu0 0
  %263 = vmatpush1.bf16.msra.mxu0 0
  %264 = vmatprep.subr.bf16.mxu0 0
  %265 = vmatpush1.bf16.msra.mxu0 0
  %266 = vmatprep.subr.bf16.mxu0 0
  %267 = vmatpush1.bf16.msra.mxu0 0
  %268 = vmatprep.subr.bf16.mxu0 0
  %269 = vmatpush1.bf16.msra.mxu0 0
  %270 = vmatprep.subr.bf16.mxu0 0
  %271 = vmatpush1.bf16.msra.mxu0 0
  %272 = vmatprep.subr.bf16.mxu0 0
  %273 = vmatpush1.bf16.msra.mxu0 0
  %274 = vmatprep.mubr.bf16.mxu0 0
  %275 = vmatmul.mubr.bf16.gmra.mrb[0].mxu0 %v240
  %v276 = vpop.f32.mrb[0].mxu0
  %v277 = vadd.f32 %v213, %v276
  %v278 = vpop.f32.mrb[0].mxu0
  %v279 = vpop.f32.mrb[0].mxu0
  %v280 = vpop.f32.mrb[0].mxu0
  %281 = vdwg.mxu0
  %v282 = vmax.f32 %v277, 0.0
  %v283 = vld [vmem:[%s4 + $0x3] sm:$0x1]
  %v284 = vlaneseq
  %v285 = vshrl.u32 %v284, 7
  %v286 = vsub.s32 0, %v285
  %v287 = vrot.slane %v283, %v286
  %v288 = vmul.f32 %v282, %v287
  %v289 = vsel %vm44, %v288, 0.0
  %290 = vadd.xlane.f32.xlu0 %v289
  %v291 = vpop.xlane.xlu0 %290
  %v292 = vld [vmem:[%s4 + $0x4] sm:$0x1]
  %v293 = vlaneseq
  %v294 = vshrl.u32 %v293, 7
  %v295 = vsub.s32 0, %v294
  %v296 = vrot.slane %v292, %v295
  %v297 = vadd.f32 %v291, %v296
  %vm298 = vcmask 7168
  %299 = vst.msk [vmem:[%s5] sm:$0xff] %vm298, %v297
  // Predicated region
  $region22: #{tpu_custom_call.1} parent=0 // pred_check
    _
  $region23: #{tpu_custom_call.1} parent=0 // pred_check_branch
    %301 = sbr.rel (0) target = $region25
  $region24: #{tpu_custom_call.1} parent=0 // pred_region
    _
  $region25: #{tpu_custom_call.1} parent=0 // pred_fallthru
    _
  // Predicated region
  $region26: #{tpu_custom_call.1} parent=0 // pred_check
    _
  $region27: #{tpu_custom_call.1} parent=0 // pred_check_branch
    %303 = sbr.rel (0) target = $region29
  $region28: #{tpu_custom_call.1} parent=0 // pred_region
    _
  $region29: #{tpu_custom_call.1} parent=0 // pred_fallthru
    _

</llo_original>
